<compile_context>
chip_gen: v7x
topology: tpu7x:2x2x1
jax: 0.10.0
libtpu: 0.0.40
codegen_flags: <defaults>
</compile_context>

<pallas_src>
import functools

import jax
import jax.numpy as jnp
from jax.experimental import pallas as pl
from jax.experimental.pallas import tpu as pltpu

# ----------------------------- config --------------------------------------
B      = 2      # batch
T_SRC  = 8      # source sequence length
T_TGT  = 8      # target sequence length
H      = 128    # hidden size (lane-dense: one full 128-lane vreg row)
V      = 512    # vocab size (multiple of TV for lane tiling)
TV     = 256    # lm_head vocab tile (256 = v6e/v7x MXU width; use 128 on v5e)


# ------------------------- fused Pallas kernel ------------------------------
def _fused_head_kernel(tv, x_ref, wd_ref, bd_ref, et_ref, lbl_ref, val_ref,
                       out_ref, h_sc, m_sc, l_sc, p_sc):
    # x:   [M, H]  bf16   decoder output rows (B*T, b-major, M padded to 8k)
    # wd:  [H, H]  bf16   dense weight in [in, out] layout
    # bd:  [1, H]  f32    dense bias
    # et:  [H, TV] bf16   vocab tile of E^T (tied lm_head weight, lane-dense)
    # lbl: [M, 1]  i32    shifted labels
    # val: [M, 1]  f32    combined validity mask (active_loss & label != -1)
    # out: [1, 2]  f32    (masked nll sum, valid count) written on last step
    j = pl.program_id(0)

    @pl.when(j == 0)
    def _():
        # hidden = tanh(x @ Wd + b): computed once, kept in VMEM for all tiles.
        h = jnp.dot(x_ref[...], wd_ref[...], preferred_element_type=jnp.float32)
        h = jnp.tanh(h + bd_ref[...])
        h_sc[...] = h.astype(h_sc.dtype)
        m_sc[...] = jnp.full_like(m_sc, -jnp.inf)   # running max
        l_sc[...] = jnp.zeros_like(l_sc)            # running sum of exp
        p_sc[...] = jnp.zeros_like(p_sc)            # picked (label) logit

    # logits tile: [M, TV] f32 (bf16 MXU operands, f32 accumulation).
    logits = jnp.dot(h_sc[...], et_ref[...], preferred_element_type=jnp.float32)

    # online logsumexp across vocab tiles
    m_prev = m_sc[...]
    m_new = jnp.maximum(m_prev, jnp.max(logits, axis=-1, keepdims=True))
    alpha = jnp.exp(m_prev - m_new)
    l_sc[...] = alpha * l_sc[...] + jnp.sum(jnp.exp(logits - m_new),
                                            axis=-1, keepdims=True)
    m_sc[...] = m_new

    # accumulate the logit at the label position (label lies in exactly one tile)
    col = jax.lax.broadcasted_iota(jnp.int32, logits.shape, 1) + j * tv
    p_sc[...] = p_sc[...] + jnp.sum(
        jnp.where(col == lbl_ref[...], logits, 0.0), axis=-1, keepdims=True)

    @pl.when(j == pl.num_programs(0) - 1)
    def _():
        lse = m_sc[...] + jnp.log(l_sc[...])        # [M, 1]
        nll = lse - p_sc[...]                       # [M, 1]
        v = val_ref[...]
        s = jnp.sum(nll * v)
        c = jnp.sum(v)
        lane = jax.lax.broadcasted_iota(jnp.int32, (1, 2), 1)
        out_ref[...] = jnp.where(lane == 0, s, c)


def fused_head_loss(x, w_d_io, b_d, e_t, labels, valid, tv=TV):
    """Fused tanh(dense(x)) -> x @ E^T -> masked CE. Returns (nll_sum, count)."""
    M, Hh = x.shape
    Vv = e_t.shape[1]
    assert Vv % tv == 0

    # Pad rows to a sublane multiple of 8; padded rows have validity 0 and
    # contribute nothing to the loss sum / count.
    M_pad = ((M + 7) // 8) * 8
    if M_pad != M:
        pad = M_pad - M
        x = jnp.pad(x, ((0, pad), (0, 0)))
        labels = jnp.pad(labels, ((0, pad), (0, 0)))
        valid = jnp.pad(valid, ((0, pad), (0, 0)))
        M = M_pad

    out = pl.pallas_call(
        functools.partial(_fused_head_kernel, tv),
        out_shape=jax.ShapeDtypeStruct((1, 2), jnp.float32),
        grid=(Vv // tv,),
        in_specs=[
            pl.BlockSpec((M, Hh), lambda j: (0, 0)),   # x (resident across tiles)
            pl.BlockSpec((Hh, Hh), lambda j: (0, 0)),  # dense weight [in,out]
            pl.BlockSpec((1, Hh), lambda j: (0, 0)),   # dense bias
            pl.BlockSpec((Hh, tv), lambda j: (0, j)),  # E^T vocab tile (lane-dense)
            pl.BlockSpec((M, 1), lambda j: (0, 0)),    # labels
            pl.BlockSpec((M, 1), lambda j: (0, 0)),    # validity mask
        ],
        out_specs=pl.BlockSpec((1, 2), lambda j: (0, 0)),
        scratch_shapes=[
            pltpu.VMEM((M, Hh), jnp.bfloat16),   # hidden (MXU LHS for lm_head)
            pltpu.VMEM((M, 1), jnp.float32),     # running max
            pltpu.VMEM((M, 1), jnp.float32),     # running sum-exp
            pltpu.VMEM((M, 1), jnp.float32),     # picked logit
        ],
        compiler_params=pltpu.CompilerParams(
            dimension_semantics=("arbitrary",)),       # vocab axis is a reduction
    )(x, w_d_io, b_d.reshape(1, Hh), e_t, labels, valid)
    return out[0, 0], out[0, 1]


# ------------------- encoder / decoder stand-ins (plain JAX) ---------------
def decoder_standin(p, tgt_TBH, mem_TBH, tgt_mask, mem_pad):
    # TODO(synk): encoder/decoder are external nn.Modules in the reference; this is a
    # deterministic single-layer single-head transformer-decoder stand-in (glue, plain JAX).
    Tt, Bb, Hh = tgt_TBH.shape
    x = jnp.transpose(tgt_TBH, (1, 0, 2))            # [B, Tt, H]
    m = jnp.transpose(mem_TBH, (1, 0, 2))            # [B, Ts, H]
    scale = 1.0 / jnp.sqrt(jnp.float32(Hh))

    # masked self-attention (additive causal mask, same as -10000*(1-tril))
    q, k, v = x @ p["wq"], x @ p["wk"], x @ p["wv"]
    s = jnp.einsum("bth,bsh->bts", q, k) * scale + tgt_mask[None, :, :]
    x = x + jnp.einsum("bts,bsh->bth", jax.nn.softmax(s, -1), v) @ p["wo"]

    # cross-attention with memory_key_padding_mask (True = padded key)
    q, k, v = x @ p["cq"], m @ p["ck"], m @ p["cv"]
    s = jnp.einsum("bth,bsh->bts", q, k) * scale
    s = jnp.where(mem_pad[:, None, :], -1e9, s)
    x = x + jnp.einsum("bts,bsh->bth", jax.nn.softmax(s, -1), v) @ p["co"]

    # feed-forward
    x = x + jax.nn.relu(x @ p["ffn1"]) @ p["ffn2"]
    return jnp.transpose(x, (1, 0, 2))               # [Tt, B, H]


# ----------------------------- Seq2Seq forward -----------------------------
def seq2seq_forward(p, source_ids, source_mask, target_ids, target_mask):
    E = p["embedding"]                               # [V, H], tied with lm_head

    # encoder stand-in: word-embedding lookup  →  outputs[0]: [B, Ts, H]
    enc = E[source_ids]
    encoder_output = jnp.transpose(enc, (1, 0, 2))   # [Ts, B, H]

    Tt = target_ids.shape[1]
    bias = jnp.tril(jnp.ones((Tt, Tt), jnp.float32))
    attn_mask = -10000.0 * (1.0 - bias)
    tgt_embeddings = jnp.transpose(E[target_ids], (1, 0, 2))   # [Tt, B, H]
    mem_pad = ~(source_mask.astype(bool))

    out = decoder_standin(p, tgt_embeddings, encoder_output, attn_mask, mem_pad)
    out_bth = jnp.transpose(out, (1, 0, 2))          # [B, Tt, H] (PyTorch row order)
    Bb, Tt_, Hh = out_bth.shape
    M = Bb * Tt_

    # host-side: shift only the tiny label / mask tensors; keep all M = B*T rows
    # and fold "drop last timestep" into the validity mask (no logits shift-slice).
    labels_shift = jnp.concatenate(
        [target_ids[:, 1:], jnp.zeros((Bb, 1), target_ids.dtype)], axis=1)   # [B, T]
    active = jnp.concatenate(
        [(target_mask[:, 1:] != 0), jnp.zeros((Bb, 1), jnp.bool_)], axis=1)  # [B, T]
    valid = active & (labels_shift != -1)            # CrossEntropyLoss(ignore_index=-1)

    # bf16 MXU operands (f32 accumulation / tanh / CE math inside the kernel).
    # Params are closed over → these casts/transposes are compile-time constants.
    x_bf16 = out_bth.reshape(M, Hh).astype(jnp.bfloat16)
    e_t = E.T.astype(jnp.bfloat16)                   # [H, V] lane-dense lm_head RHS

    loss_sum, valid_cnt = fused_head_loss(
        x_bf16,
        p["dense_w_io"].astype(jnp.bfloat16),        # [in, out] layout (no .T at call)
        p["dense_b"].astype(jnp.float32),
        e_t,
        labels_shift.reshape(M, 1).astype(jnp.int32),
        valid.reshape(M, 1).astype(jnp.float32))

    loss = loss_sum / jnp.maximum(valid_cnt, 1.0)
    active_cnt = jnp.sum(active.astype(jnp.float32))
    return loss, loss * active_cnt, active_cnt

    # TODO(synk): beam-search inference branch (target_ids is None) relies on
    # host-side dynamic control flow / topk bookkeeping and is not kernelized.


# ----------------------------- params --------------------------------------
def init_params(key):
    ks = jax.random.split(key, 12)
    s = 0.02
    n = lambda k, shape: jax.random.normal(k, shape, jnp.float32) * s
    return {
        "embedding": n(ks[0], (V, H)),
        # dense weight stored in [in, out] layout (== nn.Linear(H,H).weight.T)
        "dense_w_io": n(ks[1], (H, H)),
        "dense_b":    jnp.zeros((H,), jnp.float32),
        "wq": n(ks[2], (H, H)), "wk": n(ks[3], (H, H)),
        "wv": n(ks[4], (H, H)), "wo": n(ks[5], (H, H)),
        "cq": n(ks[6], (H, H)), "ck": n(ks[7], (H, H)),
        "cv": n(ks[8], (H, H)), "co": n(ks[9], (H, H)),
        "ffn1": n(ks[10], (H, 4 * H)),
        "ffn2": n(ks[11], (4 * H, H)),
    }


# ----------------------------- main -----------------------------------------
if __name__ == "__main__":
    key = jax.random.PRNGKey(0)
    pkey, k_src, k_tgt = jax.random.split(key, 3)
    params = init_params(pkey)

    source_ids = jax.random.randint(k_src, (B, T_SRC), 0, V, dtype=jnp.int32)
    source_mask = jnp.ones((B, T_SRC), jnp.int32).at[1, 6:].set(0)   # pad tail of row 1
    target_ids = jax.random.randint(k_tgt, (B, T_TGT), 0, V, dtype=jnp.int32)
    target_mask = jnp.ones((B, T_TGT), jnp.int32).at[1, 5:].set(0)   # pad tail of row 1

    fwd = jax.jit(functools.partial(seq2seq_forward, params))
    loss, loss_scaled, active = fwd(source_ids, source_mask, target_ids, target_mask)
    jax.block_until_ready((loss, loss_scaled, active))
    print("KERNEL_OK")
</pallas_src>

<mosaic_0001>
module attributes {stable_mosaic.version = 11 : i64} {
  func.func @_fused_head_kernel(%arg0: i32, %arg1: memref<16x128xbf16, #tpu.memory_space<vmem>>, %arg2: memref<128x128xbf16, #tpu.memory_space<vmem>>, %arg3: memref<1x128xf32, #tpu.memory_space<vmem>>, %arg4: memref<128x256xbf16, #tpu.memory_space<vmem>>, %arg5: memref<16x1xi32, #tpu.memory_space<vmem>>, %arg6: memref<16x1xf32, #tpu.memory_space<vmem>>, %arg7: memref<1x2xf32, #tpu.memory_space<vmem>>, %arg8: memref<16x128xbf16, #tpu.memory_space<vmem>>, %arg9: memref<16x1xf32, #tpu.memory_space<vmem>>, %arg10: memref<16x1xf32, #tpu.memory_space<vmem>>, %arg11: memref<16x1xf32, #tpu.memory_space<vmem>>) attributes {dimension_semantics = [#tpu.dimension_semantics<arbitrary>], iteration_bounds = array<i64: 2>, scalar_prefetch = 0 : i64, scratch_operands = 4 : i64, tpu.core_type = #tpu.core_type<tc>, window_params = [{pipeline_mode = #tpu.pipeline_mode<synchronous>, transform_indices = @transform_0, window_bounds = array<i64: 16, 128>}, {pipeline_mode = #tpu.pipeline_mode<synchronous>, transform_indices = @transform_1, window_bounds = array<i64: 128, 128>}, {pipeline_mode = #tpu.pipeline_mode<synchronous>, transform_indices = @transform_2, window_bounds = array<i64: 1, 128>}, {transform_indices = @transform_3, window_bounds = array<i64: 128, 256>}, {pipeline_mode = #tpu.pipeline_mode<synchronous>, transform_indices = @transform_4, window_bounds = array<i64: 16, 1>}, {pipeline_mode = #tpu.pipeline_mode<synchronous>, transform_indices = @transform_5, window_bounds = array<i64: 16, 1>}, {pipeline_mode = #tpu.pipeline_mode<synchronous>, transform_indices = @transform_6, window_bounds = array<i64: 1, 2>}]} {
    %c0_i32 = arith.constant 0 : i32
    %0 = arith.cmpi eq, %arg0, %c0_i32 : i32
    %1 = arith.extui %0 : i1 to i32
    %c0_i32_0 = arith.constant 0 : i32
    %2 = arith.cmpi ne, %1, %c0_i32_0 : i32
    scf.if %2 {
      %c0_23 = arith.constant 0 : index
      %c0_24 = arith.constant 0 : index
      %39 = vector.load %arg1[%c0_23, %c0_24] : memref<16x128xbf16, #tpu.memory_space<vmem>>, vector<16x128xbf16>
      %c0_25 = arith.constant 0 : index
      %c0_26 = arith.constant 0 : index
      %40 = vector.load %arg2[%c0_25, %c0_26] : memref<128x128xbf16, #tpu.memory_space<vmem>>, vector<128x128xbf16>
      %cst_27 = arith.constant dense<0.000000e+00> : vector<16x128xf32>
      %41 = tpu.matmul %39, %40, %cst_27 {dimension_numbers = #tpu.dot_dimension_numbers<[1], [0], [0], [1], [0, 0, 1, 1], [], []>} : vector<16x128xbf16>, vector<128x128xbf16>, vector<16x128xf32> -> vector<16x128xf32>
      %c0_28 = arith.constant 0 : index
      %c0_29 = arith.constant 0 : index
      %42 = vector.load %arg3[%c0_28, %c0_29] : memref<1x128xf32, #tpu.memory_space<vmem>>, vector<1x128xf32>
      %43 = vector.broadcast %42 : vector<1x128xf32> to vector<16x128xf32>
      %44 = arith.addf %41, %43 : vector<16x128xf32>
      %45 = math.tanh %44 : vector<16x128xf32>
      %46 = arith.truncf %45 : vector<16x128xf32> to vector<16x128xbf16>
      %c0_30 = arith.constant 0 : index
      %c0_31 = arith.constant 0 : index
      %47 = vector.load %arg8[%c0_30, %c0_31] : memref<16x128xbf16, #tpu.memory_space<vmem>>, vector<16x128xbf16>
      tpu.vector_store %arg8[%c0_30, %c0_31], %46 {strides = array<i32>} : memref<16x128xbf16, #tpu.memory_space<vmem>>, vector<16x128xbf16>,
      %cst_32 = arith.constant 0xFF800000 : f32
      %48 = vector.broadcast %cst_32 : f32 to vector<16x1xf32>
      %c0_33 = arith.constant 0 : index
      %c0_34 = arith.constant 0 : index
      %49 = vector.load %arg9[%c0_33, %c0_34] : memref<16x1xf32, #tpu.memory_space<vmem>>, vector<16x1xf32>
      tpu.vector_store %arg9[%c0_33, %c0_34], %48 {strides = array<i32>} : memref<16x1xf32, #tpu.memory_space<vmem>>, vector<16x1xf32>,
      %cst_35 = arith.constant 0.000000e+00 : f32
      %50 = vector.broadcast %cst_35 : f32 to vector<16x1xf32>
      %c0_36 = arith.constant 0 : index
      %c0_37 = arith.constant 0 : index
      %51 = vector.load %arg10[%c0_36, %c0_37] : memref<16x1xf32, #tpu.memory_space<vmem>>, vector<16x1xf32>
      tpu.vector_store %arg10[%c0_36, %c0_37], %50 {strides = array<i32>} : memref<16x1xf32, #tpu.memory_space<vmem>>, vector<16x1xf32>,
      %cst_38 = arith.constant 0.000000e+00 : f32
      %52 = vector.broadcast %cst_38 : f32 to vector<16x1xf32>
      %c0_39 = arith.constant 0 : index
      %c0_40 = arith.constant 0 : index
      %53 = vector.load %arg11[%c0_39, %c0_40] : memref<16x1xf32, #tpu.memory_space<vmem>>, vector<16x1xf32>
      tpu.vector_store %arg11[%c0_39, %c0_40], %52 {strides = array<i32>} : memref<16x1xf32, #tpu.memory_space<vmem>>, vector<16x1xf32>,
    } else {
    }
    %c0 = arith.constant 0 : index
    %c0_1 = arith.constant 0 : index
    %3 = vector.load %arg8[%c0, %c0_1] : memref<16x128xbf16, #tpu.memory_space<vmem>>, vector<16x128xbf16>
    %c0_2 = arith.constant 0 : index
    %c0_3 = arith.constant 0 : index
    %4 = vector.load %arg4[%c0_2, %c0_3] : memref<128x256xbf16, #tpu.memory_space<vmem>>, vector<128x256xbf16>
    %cst = arith.constant dense<0.000000e+00> : vector<16x256xf32>
    %5 = tpu.matmul %3, %4, %cst {dimension_numbers = #tpu.dot_dimension_numbers<[1], [0], [0], [1], [0, 0, 1, 1], [], []>} : vector<16x128xbf16>, vector<128x256xbf16>, vector<16x256xf32> -> vector<16x256xf32>
    %c0_4 = arith.constant 0 : index
    %c0_5 = arith.constant 0 : index
    %6 = vector.load %arg9[%c0_4, %c0_5] : memref<16x1xf32, #tpu.memory_space<vmem>>, vector<16x1xf32>
    %cst_6 = arith.constant dense<0xFF800000> : vector<16xf32>
    %7 = vector.multi_reduction <maximumf>, %5, %cst_6 [1] : vector<16x256xf32> to vector<16xf32>
    %8 = vector.shape_cast %7 : vector<16xf32> to vector<16x1xf32>
    %9 = arith.maximumf %6, %8 : vector<16x1xf32>
    %10 = arith.subf %6, %9 : vector<16x1xf32>
    %11 = math.exp %10 : vector<16x1xf32>
    %c0_7 = arith.constant 0 : index
    %c0_8 = arith.constant 0 : index
    %12 = vector.load %arg10[%c0_7, %c0_8] : memref<16x1xf32, #tpu.memory_space<vmem>>, vector<16x1xf32>
    %13 = arith.mulf %11, %12 : vector<16x1xf32>
    %14 = vector.broadcast %9 : vector<16x1xf32> to vector<16x256xf32>
    %15 = arith.subf %5, %14 : vector<16x256xf32>
    %16 = math.exp %15 : vector<16x256xf32>
    %cst_9 = arith.constant dense<0.000000e+00> : vector<16xf32>
    %17 = vector.multi_reduction <add>, %16, %cst_9 [1] : vector<16x256xf32> to vector<16xf32>
    %18 = vector.shape_cast %17 : vector<16xf32> to vector<16x1xf32>
    %19 = arith.addf %13, %18 : vector<16x1xf32>
    %c0_10 = arith.constant 0 : index
    %c0_11 = arith.constant 0 : index
    %20 = vector.load %arg10[%c0_10, %c0_11] : memref<16x1xf32, #tpu.memory_space<vmem>>, vector<16x1xf32>
    tpu.vector_store %arg10[%c0_10, %c0_11], %19 {strides = array<i32>} : memref<16x1xf32, #tpu.memory_space<vmem>>, vector<16x1xf32>,
    %c0_12 = arith.constant 0 : index
    %c0_13 = arith.constant 0 : index
    %21 = vector.load %arg9[%c0_12, %c0_13] : memref<16x1xf32, #tpu.memory_space<vmem>>, vector<16x1xf32>
    tpu.vector_store %arg9[%c0_12, %c0_13], %9 {strides = array<i32>} : memref<16x1xf32, #tpu.memory_space<vmem>>, vector<16x1xf32>,
    %22 = tpu.iota {dimensions = array<i32: 1>} : vector<16x256xi32>
    %c256_i32 = arith.constant 256 : i32
    %23 = arith.muli %arg0, %c256_i32 : i32
    %24 = vector.broadcast %23 : i32 to vector<16x256xi32>
    %25 = arith.addi %22, %24 : vector<16x256xi32>
    %c0_14 = arith.constant 0 : index
    %c0_15 = arith.constant 0 : index
    %26 = vector.load %arg11[%c0_14, %c0_15] : memref<16x1xf32, #tpu.memory_space<vmem>>, vector<16x1xf32>
    %c0_16 = arith.constant 0 : index
    %c0_17 = arith.constant 0 : index
    %27 = vector.load %arg5[%c0_16, %c0_17] : memref<16x1xi32, #tpu.memory_space<vmem>>, vector<16x1xi32>
    %28 = vector.broadcast %27 : vector<16x1xi32> to vector<16x256xi32>
    %29 = arith.cmpi eq, %25, %28 : vector<16x256xi32>
    %cst_18 = arith.constant 0.000000e+00 : f32
    %30 = vector.broadcast %cst_18 : f32 to vector<16x256xf32>
    %31 = arith.select %29, %5, %30 : vector<16x256xi1>, vector<16x256xf32>
    %cst_19 = arith.constant dense<0.000000e+00> : vector<16xf32>
    %32 = vector.multi_reduction <add>, %31, %cst_19 [1] : vector<16x256xf32> to vector<16xf32>
    %33 = vector.shape_cast %32 : vector<16xf32> to vector<16x1xf32>
    %34 = arith.addf %26, %33 : vector<16x1xf32>
    %c0_20 = arith.constant 0 : index
    %c0_21 = arith.constant 0 : index
    %35 = vector.load %arg11[%c0_20, %c0_21] : memref<16x1xf32, #tpu.memory_space<vmem>>, vector<16x1xf32>
    tpu.vector_store %arg11[%c0_20, %c0_21], %34 {strides = array<i32>} : memref<16x1xf32, #tpu.memory_space<vmem>>, vector<16x1xf32>,
    %c1_i32 = arith.constant 1 : i32
    %36 = arith.cmpi eq, %arg0, %c1_i32 : i32
    %37 = arith.extui %36 : i1 to i32
    %c0_i32_22 = arith.constant 0 : i32
    %38 = arith.cmpi ne, %37, %c0_i32_22 : i32
    scf.if %38 {
      %c0_23 = arith.constant 0 : index
      %c0_24 = arith.constant 0 : index
      %39 = vector.load %arg9[%c0_23, %c0_24] : memref<16x1xf32, #tpu.memory_space<vmem>>, vector<16x1xf32>
      %c0_25 = arith.constant 0 : index
      %c0_26 = arith.constant 0 : index
      %40 = vector.load %arg10[%c0_25, %c0_26] : memref<16x1xf32, #tpu.memory_space<vmem>>, vector<16x1xf32>
      %41 = math.log %40 : vector<16x1xf32>
      %42 = arith.addf %39, %41 : vector<16x1xf32>
      %c0_27 = arith.constant 0 : index
      %c0_28 = arith.constant 0 : index
      %43 = vector.load %arg11[%c0_27, %c0_28] : memref<16x1xf32, #tpu.memory_space<vmem>>, vector<16x1xf32>
      %44 = arith.subf %42, %43 : vector<16x1xf32>
      %c0_29 = arith.constant 0 : index
      %c0_30 = arith.constant 0 : index
      %45 = vector.load %arg6[%c0_29, %c0_30] : memref<16x1xf32, #tpu.memory_space<vmem>>, vector<16x1xf32>
      %46 = arith.mulf %44, %45 : vector<16x1xf32>
      %47 = vector.shape_cast %46 : vector<16x1xf32> to vector<1x16x1xf32>
      %cst_31 = arith.constant dense<0.000000e+00> : vector<1xf32>
      %48 = vector.multi_reduction <add>, %47, %cst_31 [1, 2] : vector<1x16x1xf32> to vector<1xf32>
      %49 = vector.shape_cast %48 : vector<1xf32> to vector<1x1x1xf32>
      %50 = vector.extract %49[0, 0, 0] : f32 from vector<1x1x1xf32>
      %51 = vector.shape_cast %45 : vector<16x1xf32> to vector<1x16x1xf32>
      %cst_32 = arith.constant dense<0.000000e+00> : vector<1xf32>
      %52 = vector.multi_reduction <add>, %51, %cst_32 [1, 2] : vector<1x16x1xf32> to vector<1xf32>
      %53 = vector.shape_cast %52 : vector<1xf32> to vector<1x1x1xf32>
      %54 = vector.extract %53[0, 0, 0] : f32 from vector<1x1x1xf32>
      %55 = tpu.iota {dimensions = array<i32: 1>} : vector<1x2xi32>
      %c0_i32_33 = arith.constant 0 : i32
      %56 = vector.broadcast %c0_i32_33 : i32 to vector<1x2xi32>
      %57 = arith.cmpi eq, %55, %56 : vector<1x2xi32>
      %58 = vector.broadcast %50 : f32 to vector<1x2xf32>
      %59 = vector.broadcast %54 : f32 to vector<1x2xf32>
      %60 = arith.select %57, %58, %59 : vector<1x2xi1>, vector<1x2xf32>
      %c0_34 = arith.constant 0 : index
      %c0_35 = arith.constant 0 : index
      %61 = vector.load %arg7[%c0_34, %c0_35] : memref<1x2xf32, #tpu.memory_space<vmem>>, vector<1x2xf32>
      tpu.vector_store %arg7[%c0_34, %c0_35], %60 {strides = array<i32>} : memref<1x2xf32, #tpu.memory_space<vmem>>, vector<1x2xf32>,
    } else {
    }
    return
  }
  func.func @transform_0(%arg0: i32) -> (i32, i32) {
    %c0_i32 = arith.constant 0 : i32
    %c0_i32_0 = arith.constant 0 : i32
    %c0_i32_1 = arith.constant 0 : i32
    return %c0_i32, %c0_i32_0 : i32, i32
  }
  func.func @transform_1(%arg0: i32) -> (i32, i32) {
    %c0_i32 = arith.constant 0 : i32
    %c0_i32_0 = arith.constant 0 : i32
    %c0_i32_1 = arith.constant 0 : i32
    return %c0_i32, %c0_i32_0 : i32, i32
  }
  func.func @transform_2(%arg0: i32) -> (i32, i32) {
    %c0_i32 = arith.constant 0 : i32
    %c0_i32_0 = arith.constant 0 : i32
    %c0_i32_1 = arith.constant 0 : i32
    return %c0_i32, %c0_i32_0 : i32, i32
  }
  func.func @transform_3(%arg0: i32) -> (i32, i32) {
    %c0_i32 = arith.constant 0 : i32
    %c0_i32_0 = arith.constant 0 : i32
    return %c0_i32, %arg0 : i32, i32
  }
  func.func @transform_4(%arg0: i32) -> (i32, i32) {
    %c0_i32 = arith.constant 0 : i32
    %c0_i32_0 = arith.constant 0 : i32
    %c0_i32_1 = arith.constant 0 : i32
    return %c0_i32, %c0_i32_0 : i32, i32
  }
  func.func @transform_5(%arg0: i32) -> (i32, i32) {
    %c0_i32 = arith.constant 0 : i32
    %c0_i32_0 = arith.constant 0 : i32
    %c0_i32_1 = arith.constant 0 : i32
    return %c0_i32, %c0_i32_0 : i32, i32
  }
  func.func @transform_6(%arg0: i32) -> (i32, i32) {
    %c0_i32 = arith.constant 0 : i32
    %c0_i32_0 = arith.constant 0 : i32
    %c0_i32_1 = arith.constant 0 : i32
    return %c0_i32, %c0_i32_0 : i32, i32
  }
}

</mosaic_0001>

<llo_original>
// kernel: seq2seq_forward.1
$region0: #{seq2seq_forward.1}
  #allocation0 [shape = 'u32[]', space=smem, size = 0x4, offset = 0x4, fixed_abs, tag = 'smem constant byte address 0x4 - core index']
  #allocation1 [shape = 'u32[144,128]{1,0:T(1,128)}', space=vmem, size = 0x12000, scoped, tag = 'internal scratch']
  #allocation2 [shape = 'bf16[16,128]{1,0:T(16,128)(2,1)}', space=vmem, size = 0x1000, scoped, tag = 'scratch operand']
  #allocation3 [shape = 'f32[16,1]{1,0:T(8,128)}', space=vmem, size = 0x2000, scoped, tag = 'scratch operand']
  #allocation4 [shape = 'f32[16,1]{1,0:T(8,128)}', space=vmem, size = 0x2000, scoped, tag = 'scratch operand']
  #allocation5 [shape = 'f32[16,1]{1,0:T(8,128)}', space=vmem, size = 0x2000, scoped, tag = 'scratch operand']
  %s0 = inlined_call_operand.vmem [shape: bf16[16,128], index: 0, kind: input, shape index: {}]
  %s1 = inlined_call_operand.vmem [shape: bf16[128,128], index: 1, kind: input, shape index: {}]
  %s2 = inlined_call_operand.vmem [shape: f32[1,128], index: 2, kind: input, shape index: {}]
  %s3 = inlined_call_operand.vmem [shape: bf16[128,512], index: 3, kind: input, shape index: {}]
  %s4 = inlined_call_operand.vmem [shape: s32[16,1], index: 4, kind: input, shape index: {}]
  %s5 = inlined_call_operand.vmem [shape: f32[16,1], index: 5, kind: input, shape index: {}]
  %s6 = inlined_call_operand.vmem [shape: f32[1,2], index: 6, kind: output, shape index: {}]
  %s7 = sld [smem:[#allocation0]]
  $region103: #{seq2seq_forward.1} parent=0
    _
  %s9 = ssub.s32 1, %s7
  %s10 = scalar_select 0, %s9, %s7
  $region1: #{seq2seq_forward.1} parent=0
    #allocation6 [shape = 'u8[131072]{0}', space=vmem, size = 0x20000, scoped, tag = 'input window, operand 3']
    loop: start=0, step=1, limit=4
    $region2: #{seq2seq_forward.1} parent=1 // loop_pre_header
      _
    $region3: #{seq2seq_forward.1} parent=1 // loop_header
      %s12 = sphi 0, %s16
      %p13 = scmp.ge.s32.totalorder %s12, 4
      %s20 = sphi 0, %s20
      %s22 = sphi 0, %s20
      %s23 = sphi 0, %s22
      %s37 = sphi 0, %s23
      %s41 = sphi 0, %s41
      %s43 = sphi 0, %s41
      %s44 = sphi 0, %s43
      %s58 = sphi 0, %s44
      %s62 = sphi 0, %s62
      %s64 = sphi 0, %s62
      %s65 = sphi 0, %s64
      %s79 = sphi 0, %s65
      %s85 = sphi 0, %s87
      %s88 = sphi 0, %s85
      %s89 = sphi 0, %s88
      %s105 = sphi 0, %s89
      %s109 = sphi 0, %s109
      %s111 = sphi 0, %s109
      %s112 = sphi 0, %s111
      %s126 = sphi 0, %s112
      %s130 = sphi 0, %s130
      %s132 = sphi 0, %s130
      %s133 = sphi 0, %s132
      %s147 = sphi 0, %s133
      %s151 = sphi 0, %s151
      %s153 = sphi 0, %s151
      %s154 = sphi 0, %s153
      %s168 = sphi 0, %s154
    $region4: #{seq2seq_forward.1} parent=1 // loop_header_branch
      %15 = sbr.rel (%p13) target = $region8
    $region5: #{seq2seq_forward.1} parent=1 // loop_body
      %s17 = ssub.s32 %s12, 1
      %s18 = ssub.s32 %s12, 2
      %s19 = sadd.s32 %s12, 1
      %s21 = sadd.s32 %s20, 1
      %p24 = scmp.eq.s32.totalorder %s12, 1
      %p25 = scmp.ne.s32.totalorder %s20, %s22
      %p26 = scmp.eq.s32.totalorder %s12, 0
      %p27 = por %p25, %p26
      %p28 = scmp.ne.s32.totalorder %s20, %s22
      %p29 = scmp.eq.s32.totalorder %s17, 1
      %p30 = por %p28, %p29
      %p31 = scmp.ne.s32.totalorder %s22, %s23
      %p32 = scmp.eq.s32.totalorder %s17, 0
      %p33 = por %p31, %p32
      %p34 = scmp.ne.s32.totalorder %s22, %s23
      %p35 = scmp.eq.s32.totalorder %s18, 1
      %p36 = por %p34, %p35
      %p38 = scmp.ne.s32.totalorder %s23, %s37
      %p39 = scmp.eq.s32.totalorder %s18, 0
      %p40 = por %p38, %p39
      %s42 = sadd.s32 %s41, 1
      %p45 = scmp.eq.s32.totalorder %s12, 1
      %p46 = scmp.ne.s32.totalorder %s41, %s43
      %p47 = scmp.eq.s32.totalorder %s12, 0
      %p48 = por %p46, %p47
      %p49 = scmp.ne.s32.totalorder %s41, %s43
      %p50 = scmp.eq.s32.totalorder %s17, 1
      %p51 = por %p49, %p50
      %p52 = scmp.ne.s32.totalorder %s43, %s44
      %p53 = scmp.eq.s32.totalorder %s17, 0
      %p54 = por %p52, %p53
      %p55 = scmp.ne.s32.totalorder %s43, %s44
      %p56 = scmp.eq.s32.totalorder %s18, 1
      %p57 = por %p55, %p56
      %p59 = scmp.ne.s32.totalorder %s44, %s58
      %p60 = scmp.eq.s32.totalorder %s18, 0
      %p61 = por %p59, %p60
      %s63 = sadd.s32 %s62, 1
      %p66 = scmp.eq.s32.totalorder %s12, 1
      %p67 = scmp.ne.s32.totalorder %s62, %s64
      %p68 = scmp.eq.s32.totalorder %s12, 0
      %p69 = por %p67, %p68
      %p70 = scmp.ne.s32.totalorder %s62, %s64
      %p71 = scmp.eq.s32.totalorder %s17, 1
      %p72 = por %p70, %p71
      %p73 = scmp.ne.s32.totalorder %s64, %s65
      %p74 = scmp.eq.s32.totalorder %s17, 0
      %p75 = por %p73, %p74
      %p76 = scmp.ne.s32.totalorder %s64, %s65
      %p77 = scmp.eq.s32.totalorder %s18, 1
      %p78 = por %p76, %p77
      %p80 = scmp.ne.s32.totalorder %s65, %s79
      %p81 = scmp.eq.s32.totalorder %s18, 0
      %p82 = por %p80, %p81
      %s83 = ssub.s32 %s12, %s19
      %p84 = scmp.eq.s32.totalorder %s83, 0
      %s86 = sadd.s32 %s85, 1
      %s87 = scalar_select %p84, %s85, %s86
      %p90 = pneg %p84
      %p91 = scmp.eq.s32.totalorder %s12, 1
      %p92 = por %p90, %p91
      %p93 = scmp.ne.s32.totalorder %s85, %s88
      %p94 = scmp.eq.s32.totalorder %s12, 0
      %p95 = por %p93, %p94
      %p96 = scmp.ne.s32.totalorder %s85, %s88
      %p97 = scmp.eq.s32.totalorder %s17, 1
      %p98 = por %p96, %p97
      %p99 = scmp.ne.s32.totalorder %s88, %s89
      %p100 = scmp.eq.s32.totalorder %s17, 0
      %p101 = por %p99, %p100
      %p102 = scmp.ne.s32.totalorder %s88, %s89
      %p103 = scmp.eq.s32.totalorder %s18, 1
      %p104 = por %p102, %p103
      %p106 = scmp.ne.s32.totalorder %s89, %s105
      %p107 = scmp.eq.s32.totalorder %s18, 0
      %p108 = por %p106, %p107
      %s110 = sadd.s32 %s109, 1
      %p113 = scmp.eq.s32.totalorder %s12, 1
      %p114 = scmp.ne.s32.totalorder %s109, %s111
      %p115 = scmp.eq.s32.totalorder %s12, 0
      %p116 = por %p114, %p115
      %p117 = scmp.ne.s32.totalorder %s109, %s111
      %p118 = scmp.eq.s32.totalorder %s17, 1
      %p119 = por %p117, %p118
      %p120 = scmp.ne.s32.totalorder %s111, %s112
      %p121 = scmp.eq.s32.totalorder %s17, 0
      %p122 = por %p120, %p121
      %p123 = scmp.ne.s32.totalorder %s111, %s112
      %p124 = scmp.eq.s32.totalorder %s18, 1
      %p125 = por %p123, %p124
      %p127 = scmp.ne.s32.totalorder %s112, %s126
      %p128 = scmp.eq.s32.totalorder %s18, 0
      %p129 = por %p127, %p128
      %s131 = sadd.s32 %s130, 1
      %p134 = scmp.eq.s32.totalorder %s12, 1
      %p135 = scmp.ne.s32.totalorder %s130, %s132
      %p136 = scmp.eq.s32.totalorder %s12, 0
      %p137 = por %p135, %p136
      %p138 = scmp.ne.s32.totalorder %s130, %s132
      %p139 = scmp.eq.s32.totalorder %s17, 1
      %p140 = por %p138, %p139
      %p141 = scmp.ne.s32.totalorder %s132, %s133
      %p142 = scmp.eq.s32.totalorder %s17, 0
      %p143 = por %p141, %p142
      %p144 = scmp.ne.s32.totalorder %s132, %s133
      %p145 = scmp.eq.s32.totalorder %s18, 1
      %p146 = por %p144, %p145
      %p148 = scmp.ne.s32.totalorder %s133, %s147
      %p149 = scmp.eq.s32.totalorder %s18, 0
      %p150 = por %p148, %p149
      %s152 = sadd.s32 %s151, 1
      %p155 = scmp.eq.s32.totalorder %s12, 1
      %p156 = scmp.ne.s32.totalorder %s151, %s153
      %p157 = scmp.eq.s32.totalorder %s12, 0
      %p158 = por %p156, %p157
      %p159 = scmp.ne.s32.totalorder %s151, %s153
      %p160 = scmp.eq.s32.totalorder %s17, 1
      %p161 = por %p159, %p160
      %p162 = scmp.ne.s32.totalorder %s153, %s154
      %p163 = scmp.eq.s32.totalorder %s17, 0
      %p164 = por %p162, %p163
      %p165 = scmp.ne.s32.totalorder %s153, %s154
      %p166 = scmp.eq.s32.totalorder %s18, 1
      %p167 = por %p165, %p166
      %p169 = scmp.ne.s32.totalorder %s154, %s168
      %p170 = scmp.eq.s32.totalorder %s18, 0
      %p171 = por %p169, %p170
      %p172 = scmp.le.s32.totalorder 1, %s12
      %p173 = scmp.lt.s32.totalorder %s12, 3
      %p174 = pnand %p172, %p173
      %p175 = pneg %p174
      // Predicated region
      $region9: #{seq2seq_forward.1} parent=5 // pred_check
        _
      $region10: #{seq2seq_forward.1} parent=5 // pred_check_branch
        %177 = sbr.rel (%p174) target = $region12
      $region11: #{seq2seq_forward.1} parent=5 // pred_region
        %s178 = ssub.s32 %s12, 1
        // Predicated region
        $region13: #{seq2seq_forward.1} parent=11 // pred_check
          %p179 = pneg %p33
        $region14: #{seq2seq_forward.1} parent=11 // pred_check_branch
          %181 = sbr.rel (%p179) target = $region16
        $region15: #{seq2seq_forward.1} parent=11 // pred_region
          _
        $region16: #{seq2seq_forward.1} parent=11 // pred_fallthru
          _
        // Predicated region
        $region17: #{seq2seq_forward.1} parent=11 // pred_check
          %p182 = pneg %p54
        $region18: #{seq2seq_forward.1} parent=11 // pred_check_branch
          %184 = sbr.rel (%p182) target = $region20
        $region19: #{seq2seq_forward.1} parent=11 // pred_region
          _
        $region20: #{seq2seq_forward.1} parent=11 // pred_fallthru
          _
        // Predicated region
        $region21: #{seq2seq_forward.1} parent=11 // pred_check
          %p185 = pneg %p75
        $region22: #{seq2seq_forward.1} parent=11 // pred_check_branch
          %187 = sbr.rel (%p185) target = $region24
        $region23: #{seq2seq_forward.1} parent=11 // pred_region
          _
        $region24: #{seq2seq_forward.1} parent=11 // pred_fallthru
          _
        // Predicated region
        $region25: #{seq2seq_forward.1} parent=11 // pred_check
          %p188 = pneg %p122
        $region26: #{seq2seq_forward.1} parent=11 // pred_check_branch
          %190 = sbr.rel (%p188) target = $region28
        $region27: #{seq2seq_forward.1} parent=11 // pred_region
          _
        $region28: #{seq2seq_forward.1} parent=11 // pred_fallthru
          _
        // Predicated region
        $region29: #{seq2seq_forward.1} parent=11 // pred_check
          %p191 = pneg %p143
        $region30: #{seq2seq_forward.1} parent=11 // pred_check_branch
          %193 = sbr.rel (%p191) target = $region32
        $region31: #{seq2seq_forward.1} parent=11 // pred_region
          _
        $region32: #{seq2seq_forward.1} parent=11 // pred_fallthru
          _
      $region12: #{seq2seq_forward.1} parent=5 // pred_fallthru
        _
      %p194 = scmp.lt.s32.totalorder %s12, 2
      // Predicated region
      $region33: #{seq2seq_forward.1} parent=5 // pred_check
        %p195 = pneg %p194
      $region34: #{seq2seq_forward.1} parent=5 // pred_check_branch
        %197 = sbr.rel (%p195) target = $region36
      $region35: #{seq2seq_forward.1} parent=5 // pred_region
        // Predicated region
        $region37: #{seq2seq_forward.1} parent=35 // pred_check
          %p198 = pneg %p95
        $region38: #{seq2seq_forward.1} parent=35 // pred_check_branch
          %200 = sbr.rel (%p198) target = $region40
        $region39: #{seq2seq_forward.1} parent=35 // pred_region
          %s201 = sand.u32 %s85, 1
          %s202 = sand.u32 %s85, 1
          %s203 = smul.addr %s202, 128
          %s204 = scalar_lea.vmem [#allocation6], %s203
          %s205 = smul.u32 2, %s12
          %s206 = smul.addr %s205, 4
          %s207 = scalar_lea.vmem %s3, %s206
          // Predicated region
          $region41: #{seq2seq_forward.1} parent=39 // pred_check
            _
          $region42: #{seq2seq_forward.1} parent=39 // pred_check_branch
            %209 = sbr.rel (0) target = $region44
          $region43: #{seq2seq_forward.1} parent=39 // pred_region
            // Predicated region
            $region45: #{seq2seq_forward.1} parent=43 // pred_check
              _
            $region46: #{seq2seq_forward.1} parent=43 // pred_check_branch
              %211 = sbr.rel (0) target = $region48
            $region47: #{seq2seq_forward.1} parent=43 // pred_region
              // Predicated region
              $region60: #{seq2seq_forward.1} parent=47 // pred_check
                _
              $region61: #{seq2seq_forward.1} parent=47 // pred_check_branch
                %256 = sbr.rel (0) target = $region63
              $region62: #{seq2seq_forward.1} parent=47 // pred_region
                loop: start=0, step=1, limit=1
                $region64: #{seq2seq_forward.1} parent=62 // loop_pre_header
                  _
                $region65: #{seq2seq_forward.1} parent=62 // loop_header
                  %s258 = sphi 0, %s262
                  %p259 = scmp.ge.s32.totalorder %s258, 1
                  %s263 = sphi %s207, %s207
                  %s264 = sphi %s204, %s204
                $region66: #{seq2seq_forward.1} parent=62 // loop_header_branch
                  %261 = sbr.rel (%p259) target = $region70
                $region67: #{seq2seq_forward.1} parent=62 // loop_body
                  %v265 = vld [vmem:[%s263] sm:$0xff]
                  %266 = vst [vmem:[%s264] sm:$0xff] %v265
                  %v267 = vld [vmem:[%s263 + $0x10] sm:$0xff]
                  %268 = vst [vmem:[%s264 + $0x8] sm:$0xff] %v267
                  %v269 = vld [vmem:[%s263 + $0x20] sm:$0xff]
                  %270 = vst [vmem:[%s264 + $0x10] sm:$0xff] %v269
                  %v271 = vld [vmem:[%s263 + $0x30] sm:$0xff]
                  %272 = vst [vmem:[%s264 + $0x18] sm:$0xff] %v271
                  %v273 = vld [vmem:[%s263 + $0x40] sm:$0xff]
                  %274 = vst [vmem:[%s264 + $0x20] sm:$0xff] %v273
                  %v275 = vld [vmem:[%s263 + $0x50] sm:$0xff]
                  %276 = vst [vmem:[%s264 + $0x28] sm:$0xff] %v275
                  %v277 = vld [vmem:[%s263 + $0x60] sm:$0xff]
                  %278 = vst [vmem:[%s264 + $0x30] sm:$0xff] %v277
                  %v279 = vld [vmem:[%s263 + $0x70] sm:$0xff]
                  %280 = vst [vmem:[%s264 + $0x38] sm:$0xff] %v279
                  %v281 = vld [vmem:[%s263 + $0x80] sm:$0xff]
                  %282 = vst [vmem:[%s264 + $0x40] sm:$0xff] %v281
                  %v283 = vld [vmem:[%s263 + $0x90] sm:$0xff]
                  %284 = vst [vmem:[%s264 + $0x48] sm:$0xff] %v283
                  %v285 = vld [vmem:[%s263 + $0xa0] sm:$0xff]
                  %286 = vst [vmem:[%s264 + $0x50] sm:$0xff] %v285
                  %v287 = vld [vmem:[%s263 + $0xb0] sm:$0xff]
                  %288 = vst [vmem:[%s264 + $0x58] sm:$0xff] %v287
                  %v289 = vld [vmem:[%s263 + $0xc0] sm:$0xff]
                  %290 = vst [vmem:[%s264 + $0x60] sm:$0xff] %v289
                  %v291 = vld [vmem:[%s263 + $0xd0] sm:$0xff]
                  %292 = vst [vmem:[%s264 + $0x68] sm:$0xff] %v291
                  %v293 = vld [vmem:[%s263 + $0xe0] sm:$0xff]
                  %294 = vst [vmem:[%s264 + $0x70] sm:$0xff] %v293
                  %v295 = vld [vmem:[%s263 + $0xf0] sm:$0xff]
                  %296 = vst [vmem:[%s264 + $0x78] sm:$0xff] %v295
                $region68: #{seq2seq_forward.1} parent=62 // loop_footer
                  %s262 = sadd.s32 1, %s258
                $region69: #{seq2seq_forward.1} parent=62 // loop_footer_branch
                  %257 = sbr.rel target = $region65
                $region70: #{seq2seq_forward.1} parent=62 // loop_exit
                  _
              $region63: #{seq2seq_forward.1} parent=47 // pred_fallthru
                _
              // Predicated region
              $region71: #{seq2seq_forward.1} parent=47 // pred_check
                _
              $region72: #{seq2seq_forward.1} parent=47 // pred_check_branch
                %298 = sbr.rel target = $region74
              $region73: #{seq2seq_forward.1} parent=47 // pred_region
                _
              $region74: #{seq2seq_forward.1} parent=47 // pred_fallthru
                _
            $region48: #{seq2seq_forward.1} parent=43 // pred_fallthru
              _
            // Predicated region
            $region49: #{seq2seq_forward.1} parent=43 // pred_check
              _
            $region50: #{seq2seq_forward.1} parent=43 // pred_check_branch
              %213 = sbr.rel target = $region52
            $region51: #{seq2seq_forward.1} parent=43 // pred_region
              loop: start=0, step=1, limit=1
              $region53: #{seq2seq_forward.1} parent=51 // loop_pre_header
                _
              $region54: #{seq2seq_forward.1} parent=51 // loop_header
                %s216 = sphi 0, %s220
                %p217 = scmp.ge.s32.totalorder %s216, 1
                %s221 = sphi %s207, %s207
                %s222 = sphi %s204, %s204
              $region55: #{seq2seq_forward.1} parent=51 // loop_header_branch
                %219 = sbr.rel (%p217) target = $region59
              $region56: #{seq2seq_forward.1} parent=51 // loop_body
                %v223 = vld [vmem:[%s221] sm:$0xff]
                %224 = vst [vmem:[%s222] sm:$0xff] %v223
                %v225 = vld [vmem:[%s221 + $0x10] sm:$0xff]
                %226 = vst [vmem:[%s222 + $0x8] sm:$0xff] %v225
                %v227 = vld [vmem:[%s221 + $0x20] sm:$0xff]
                %228 = vst [vmem:[%s222 + $0x10] sm:$0xff] %v227
                %v229 = vld [vmem:[%s221 + $0x30] sm:$0xff]
                %230 = vst [vmem:[%s222 + $0x18] sm:$0xff] %v229
                %v231 = vld [vmem:[%s221 + $0x40] sm:$0xff]
                %232 = vst [vmem:[%s222 + $0x20] sm:$0xff] %v231
                %v233 = vld [vmem:[%s221 + $0x50] sm:$0xff]
                %234 = vst [vmem:[%s222 + $0x28] sm:$0xff] %v233
                %v235 = vld [vmem:[%s221 + $0x60] sm:$0xff]
                %236 = vst [vmem:[%s222 + $0x30] sm:$0xff] %v235
                %v237 = vld [vmem:[%s221 + $0x70] sm:$0xff]
                %238 = vst [vmem:[%s222 + $0x38] sm:$0xff] %v237
                %v239 = vld [vmem:[%s221 + $0x80] sm:$0xff]
                %240 = vst [vmem:[%s222 + $0x40] sm:$0xff] %v239
                %v241 = vld [vmem:[%s221 + $0x90] sm:$0xff]
                %242 = vst [vmem:[%s222 + $0x48] sm:$0xff] %v241
                %v243 = vld [vmem:[%s221 + $0xa0] sm:$0xff]
                %244 = vst [vmem:[%s222 + $0x50] sm:$0xff] %v243
                %v245 = vld [vmem:[%s221 + $0xb0] sm:$0xff]
                %246 = vst [vmem:[%s222 + $0x58] sm:$0xff] %v245
                %v247 = vld [vmem:[%s221 + $0xc0] sm:$0xff]
                %248 = vst [vmem:[%s222 + $0x60] sm:$0xff] %v247
                %v249 = vld [vmem:[%s221 + $0xd0] sm:$0xff]
                %250 = vst [vmem:[%s222 + $0x68] sm:$0xff] %v249
                %v251 = vld [vmem:[%s221 + $0xe0] sm:$0xff]
                %252 = vst [vmem:[%s222 + $0x70] sm:$0xff] %v251
                %v253 = vld [vmem:[%s221 + $0xf0] sm:$0xff]
                %254 = vst [vmem:[%s222 + $0x78] sm:$0xff] %v253
              $region57: #{seq2seq_forward.1} parent=51 // loop_footer
                %s220 = sadd.s32 1, %s216
              $region58: #{seq2seq_forward.1} parent=51 // loop_footer_branch
                %215 = sbr.rel target = $region54
              $region59: #{seq2seq_forward.1} parent=51 // loop_exit
                _
            $region52: #{seq2seq_forward.1} parent=43 // pred_fallthru
              _
          $region44: #{seq2seq_forward.1} parent=39 // pred_fallthru
            _
          %299 = vnop
        $region40: #{seq2seq_forward.1} parent=35 // pred_fallthru
          _
      $region36: #{seq2seq_forward.1} parent=5 // pred_fallthru
        _
      %p300 = scmp.le.s32.totalorder 1, %s12
      %p301 = scmp.lt.s32.totalorder %s12, 3
      %p302 = pnand %p300, %p301
      %p303 = pneg %p302
      // Predicated region
      $region75: #{seq2seq_forward.1} parent=5 // pred_check
        _
      $region76: #{seq2seq_forward.1} parent=5 // pred_check_branch
        %305 = sbr.rel (%p302) target = $region78
      $region77: #{seq2seq_forward.1} parent=5 // pred_region
        %s306 = ssub.s32 %s12, 1
        %s307 = sand.u32 %s88, 1
        %s308 = sand.u32 %s88, 1
        %s309 = smul.addr %s308, 128
        %s310 = scalar_lea.vmem [#allocation6], %s309
        // Predicated region
        $region79: #{seq2seq_forward.1} parent=77 // pred_check
          %p311 = pneg %p101
        $region80: #{seq2seq_forward.1} parent=77 // pred_check_branch
          %313 = sbr.rel (%p311) target = $region82
        $region81: #{seq2seq_forward.1} parent=77 // pred_region
          _
        $region82: #{seq2seq_forward.1} parent=77 // pred_fallthru
          _
        %p314 = pneg %p33
        %p315 = pneg %p30
        %p316 = pneg %p54
        %p317 = pneg %p51
        %p318 = pneg %p75
        %p319 = pneg %p72
        %s320 = sand.u32 %s88, 1
        %s321 = sand.u32 %s88, 1
        %s322 = smul.addr %s321, 128
        %s323 = scalar_lea.vmem [#allocation6], %s322
        %p324 = pneg %p101
        %p325 = pneg %p98
        %p326 = pneg %p122
        %p327 = pneg %p119
        %p328 = pneg %p143
        %p329 = pneg %p140
        %p330 = pneg %p164
        %p331 = pneg %p161
        %s332 = smul.u32 2, %s17
        %p334 = scmp.eq.s32.totalorder %s17, 0
        // Predicated region
        $region83: #{seq2seq_forward.1} parent=77 // pred_check
          %p335 = pneg %p334
        $region84: #{seq2seq_forward.1} parent=77 // pred_check_branch
          %337 = sbr.rel (%p335) target = $region86
        $region85: #{seq2seq_forward.1} parent=77 // pred_region
          %v338 = vld [vmem:[%s0] sm:$0xf]
          %v339 = vld [vmem:[%s0 + $0x4] sm:$0xf]
          %v340 = vld [vmem:[%s1] sm:$0xf]
          %v341 = vld [vmem:[%s1 + $0x4] sm:$0xf]
          %v342 = vld [vmem:[%s1 + $0x8] sm:$0xf]
          %v343 = vld [vmem:[%s1 + $0xc] sm:$0xf]
          %v344 = vld [vmem:[%s1 + $0x10] sm:$0xf]
          %v345 = vld [vmem:[%s1 + $0x14] sm:$0xf]
          %v346 = vld [vmem:[%s1 + $0x18] sm:$0xf]
          %v347 = vld [vmem:[%s1 + $0x1c] sm:$0xf]
          %v348 = vld [vmem:[%s1 + $0x20] sm:$0xf]
          %v349 = vld [vmem:[%s1 + $0x24] sm:$0xf]
          %v350 = vld [vmem:[%s1 + $0x28] sm:$0xf]
          %v351 = vld [vmem:[%s1 + $0x2c] sm:$0xf]
          %v352 = vld [vmem:[%s1 + $0x30] sm:$0xf]
          %v353 = vld [vmem:[%s1 + $0x34] sm:$0xf]
          %v354 = vld [vmem:[%s1 + $0x38] sm:$0xf]
          %v355 = vld [vmem:[%s1 + $0x3c] sm:$0xf]
          %v356 = vld [vmem:[%s2] sm:$0x1]
          %v358 = vlaneseq
          %v359 = vshrl.u32 %v358, 7
          %v360 = vsub.s32 0, %v359
          %v361 = vrot.slane %v356, %v360
          %v365 = vunpack.c.l.b16 %v338
          %v366 = vunpack.c.l.b16 %v339
          %v367 = vpack.c.b16 %v366, %v365
          %v385 = vunpack.c.l.b16 %v340
          %v386 = vunpack.c.l.b16 %v341
          %v387 = vunpack.c.l.b16 %v342
          %v388 = vunpack.c.l.b16 %v343
          %v389 = vunpack.c.l.b16 %v344
          %v390 = vunpack.c.l.b16 %v345
          %v391 = vunpack.c.l.b16 %v346
          %v392 = vunpack.c.l.b16 %v347
          %v393 = vunpack.c.l.b16 %v348
          %v394 = vunpack.c.l.b16 %v349
          %v395 = vunpack.c.l.b16 %v350
          %v396 = vunpack.c.l.b16 %v351
          %v397 = vunpack.c.l.b16 %v352
          %v398 = vunpack.c.l.b16 %v353
          %v399 = vunpack.c.l.b16 %v354
          %v400 = vunpack.c.l.b16 %v355
          %v401 = vpack.c.b16 %v386, %v385
          %v402 = vpack.c.b16 %v388, %v387
          %v403 = vpack.c.b16 %v390, %v389
          %v404 = vpack.c.b16 %v392, %v391
          %v405 = vpack.c.b16 %v394, %v393
          %v406 = vpack.c.b16 %v396, %v395
          %v407 = vpack.c.b16 %v398, %v397
          %v408 = vpack.c.b16 %v400, %v399
          %417 = vmatprep.subr.bf16.mxu0 0
          %418 = vmatpush1.bf16.msra.mxu0 %v401
          %419 = vmatprep.subr.bf16.mxu0 0
          %420 = vmatpush1.bf16.msra.mxu0 %v402
          %421 = vmatprep.subr.bf16.mxu0 0
          %422 = vmatpush1.bf16.msra.mxu0 %v403
          %423 = vmatprep.subr.bf16.mxu0 0
          %424 = vmatpush1.bf16.msra.mxu0 %v404
          %425 = vmatprep.subr.bf16.mxu0 0
          %426 = vmatpush1.bf16.msra.mxu0 %v405
          %427 = vmatprep.subr.bf16.mxu0 0
          %428 = vmatpush1.bf16.msra.mxu0 %v406
          %429 = vmatprep.subr.bf16.mxu0 0
          %430 = vmatpush1.bf16.msra.mxu0 %v407
          %431 = vmatprep.subr.bf16.mxu0 0
          %432 = vmatpush1.bf16.msra.mxu0 %v408
          %433 = vmatprep.subr.bf16.mxu0 0
          %434 = vmatpush1.bf16.msra.mxu0 0
          %435 = vmatprep.subr.bf16.mxu0 0
          %436 = vmatpush1.bf16.msra.mxu0 0
          %437 = vmatprep.subr.bf16.mxu0 0
          %438 = vmatpush1.bf16.msra.mxu0 0
          %439 = vmatprep.subr.bf16.mxu0 0
          %440 = vmatpush1.bf16.msra.mxu0 0
          %441 = vmatprep.subr.bf16.mxu0 0
          %442 = vmatpush1.bf16.msra.mxu0 0
          %443 = vmatprep.subr.bf16.mxu0 0
          %444 = vmatpush1.bf16.msra.mxu0 0
          %445 = vmatprep.subr.bf16.mxu0 0
          %446 = vmatpush1.bf16.msra.mxu0 0
          %447 = vmatprep.subr.bf16.mxu0 0
          %448 = vmatpush1.bf16.msra.mxu0 0
          %449 = vmatprep.mubr.bf16.mxu0 0
          %450 = vmatmul.mubr.bf16.gmra.mrb[0].mxu0 %v367
          %v451 = vpop.f32.mrb[0].mxu0
          %v452 = vadd.f32 %v361, %v451
          %v453 = vpop.f32.mrb[0].mxu0
          %v454 = vpop.f32.mrb[0].mxu0
          %v455 = vadd.f32 %v361, %v454
          %v456 = vpop.f32.mrb[0].mxu0
          %457 = vdwg.mxu0
          %v458 = vtanh.pop %v452
          %v459 = vtanh.pop %v455
          %v460 = vpack.c.bf16 %v459, %v458
          %461 = vst [vmem:[#allocation2] sm:$0xff] %v460
          %vm462 = vcmask 7168
          %463 = vst.msk [vmem:[#allocation3] sm:$0xff] %vm462, -inf
          %464 = vst.msk [vmem:[#allocation3 + $0x8] sm:$0xff] %vm462, -inf
          %465 = vst.msk [vmem:[#allocation4] sm:$0xff] %vm462, 0.0
          %466 = vst.msk [vmem:[#allocation4 + $0x8] sm:$0xff] %vm462, 0.0
          %467 = vst.msk [vmem:[#allocation5] sm:$0xff] %vm462, 0.0
          %468 = vst.msk [vmem:[#allocation5 + $0x8] sm:$0xff] %vm462, 0.0
        $region86: #{seq2seq_forward.1} parent=77 // pred_fallthru
          _
        %v469 = vld [vmem:[#allocation2] sm:$0xff]
        %v470 = vld [vmem:[%s310] sm:$0xff]
        %v471 = vld [vmem:[%s310 + $0x8] sm:$0xff]
        %v472 = vld [vmem:[%s310 + $0x10] sm:$0xff]
        %v473 = vld [vmem:[%s310 + $0x18] sm:$0xff]
        %v474 = vld [vmem:[%s310 + $0x20] sm:$0xff]
        %v475 = vld [vmem:[%s310 + $0x28] sm:$0xff]
        %v476 = vld [vmem:[%s310 + $0x30] sm:$0xff]
        %v477 = vld [vmem:[%s310 + $0x38] sm:$0xff]
        %v478 = vld [vmem:[%s310 + $0x40] sm:$0xff]
        %v479 = vld [vmem:[%s310 + $0x48] sm:$0xff]
        %v480 = vld [vmem:[%s310 + $0x50] sm:$0xff]
        %v481 = vld [vmem:[%s310 + $0x58] sm:$0xff]
        %v482 = vld [vmem:[%s310 + $0x60] sm:$0xff]
        %v483 = vld [vmem:[%s310 + $0x68] sm:$0xff]
        %v484 = vld [vmem:[%s310 + $0x70] sm:$0xff]
        %v485 = vld [vmem:[%s310 + $0x78] sm:$0xff]
        %v502 = vunpack.c.l.b16 %v470
        %v503 = vunpack.c.h.b16 %v470
        %v504 = vunpack.c.l.b16 %v471
        %v505 = vunpack.c.h.b16 %v471
        %v506 = vunpack.c.l.b16 %v472
        %v507 = vunpack.c.h.b16 %v472
        %v508 = vunpack.c.l.b16 %v473
        %v509 = vunpack.c.h.b16 %v473
        %v510 = vunpack.c.l.b16 %v474
        %v511 = vunpack.c.h.b16 %v474
        %v512 = vunpack.c.l.b16 %v475
        %v513 = vunpack.c.h.b16 %v475
        %v514 = vunpack.c.l.b16 %v476
        %v515 = vunpack.c.h.b16 %v476
        %v516 = vunpack.c.l.b16 %v477
        %v517 = vunpack.c.h.b16 %v477
        %v518 = vunpack.c.l.b16 %v478
        %v519 = vunpack.c.h.b16 %v478
        %v520 = vunpack.c.l.b16 %v479
        %v521 = vunpack.c.h.b16 %v479
        %v522 = vunpack.c.l.b16 %v480
        %v523 = vunpack.c.h.b16 %v480
        %v524 = vunpack.c.l.b16 %v481
        %v525 = vunpack.c.h.b16 %v481
        %v526 = vunpack.c.l.b16 %v482
        %v527 = vunpack.c.h.b16 %v482
        %v528 = vunpack.c.l.b16 %v483
        %v529 = vunpack.c.h.b16 %v483
        %v530 = vunpack.c.l.b16 %v484
        %v531 = vunpack.c.h.b16 %v484
        %v532 = vunpack.c.l.b16 %v485
        %v533 = vunpack.c.h.b16 %v485
        %v534 = vpack.c.b16 %v504, %v502
        %v535 = vpack.c.b16 %v505, %v503
        %v536 = vpack.c.b16 %v508, %v506
        %v537 = vpack.c.b16 %v509, %v507
        %v538 = vpack.c.b16 %v512, %v510
        %v539 = vpack.c.b16 %v513, %v511
        %v540 = vpack.c.b16 %v516, %v514
        %v541 = vpack.c.b16 %v517, %v515
        %v542 = vpack.c.b16 %v520, %v518
        %v543 = vpack.c.b16 %v521, %v519
        %v544 = vpack.c.b16 %v524, %v522
        %v545 = vpack.c.b16 %v525, %v523
        %v546 = vpack.c.b16 %v528, %v526
        %v547 = vpack.c.b16 %v529, %v527
        %v548 = vpack.c.b16 %v532, %v530
        %v549 = vpack.c.b16 %v533, %v531
        %566 = vmatprep.subr.bf16.mxu0 %v535
        %567 = vmatpush1.bf16.msra.mxu0 %v534
        %568 = vmatprep.subr.bf16.mxu0 %v537
        %569 = vmatpush1.bf16.msra.mxu0 %v536
        %570 = vmatprep.subr.bf16.mxu0 %v539
        %571 = vmatpush1.bf16.msra.mxu0 %v538
        %572 = vmatprep.subr.bf16.mxu0 %v541
        %573 = vmatpush1.bf16.msra.mxu0 %v540
        %574 = vmatprep.subr.bf16.mxu0 %v543
        %575 = vmatpush1.bf16.msra.mxu0 %v542
        %576 = vmatprep.subr.bf16.mxu0 %v545
        %577 = vmatpush1.bf16.msra.mxu0 %v544
        %578 = vmatprep.subr.bf16.mxu0 %v547
        %579 = vmatpush1.bf16.msra.mxu0 %v546
        %580 = vmatprep.subr.bf16.mxu0 %v549
        %581 = vmatpush1.bf16.msra.mxu0 %v548
        %582 = vmatprep.subr.bf16.mxu0 0
        %583 = vmatpush1.bf16.msra.mxu0 0
        %584 = vmatprep.subr.bf16.mxu0 0
        %585 = vmatpush1.bf16.msra.mxu0 0
        %586 = vmatprep.subr.bf16.mxu0 0
        %587 = vmatpush1.bf16.msra.mxu0 0
        %588 = vmatprep.subr.bf16.mxu0 0
        %589 = vmatpush1.bf16.msra.mxu0 0
        %590 = vmatprep.subr.bf16.mxu0 0
        %591 = vmatpush1.bf16.msra.mxu0 0
        %592 = vmatprep.subr.bf16.mxu0 0
        %593 = vmatpush1.bf16.msra.mxu0 0
        %594 = vmatprep.subr.bf16.mxu0 0
        %595 = vmatpush1.bf16.msra.mxu0 0
        %596 = vmatprep.subr.bf16.mxu0 0
        %597 = vmatpush1.bf16.msra.mxu0 0
        %598 = vmatprep.mubr.bf16.mxu0 0
        %599 = vmatmul.mubr.bf16.gmra.mrb[0].mxu0 %v469
        %v600 = vpop.f32.mrb[0].mxu0
        %v601 = vadd.f32 0.0, %v600
        %v602 = vpop.f32.mrb[0].mxu0
        %v603 = vadd.f32 0.0, %v602
        %v604 = vpop.f32.mrb[0].mxu0
        %v605 = vadd.f32 0.0, %v604
        %v606 = vpop.f32.mrb[0].mxu0
        %v607 = vadd.f32 0.0, %v606
        %608 = vdwg.mxu0
        %v609 = vld [vmem:[#allocation3] sm:$0xff]
        %v610 = vld [vmem:[#allocation3 + $0x8] sm:$0xff]
        %v611 = vmax.f32 %v601, %v603
        %612 = vmax.xlane.f32.xlu0 %v611
        %v613 = vpop.xlane.xlu0 %612
        %v614 = vmax.f32 %v605, %v607
        %615 = vmax.xlane.f32.xlu0 %v614
        %v616 = vpop.xlane.xlu0 %615
        %v617 = vmax.f32 %v609, %v613
        %v618 = vmax.f32 %v610, %v616
        %v619 = vsub.f32 %v609, %v617
        %v620 = vsub.f32 %v610, %v618
        %v621 = vmul.f32 %v619, 1.442695
        %v622 = vpow.pop %v621
        %v623 = vmul.f32 %v620, 1.442695
        %v624 = vpow.pop %v623
        %v625 = vld [vmem:[#allocation4] sm:$0xff]
        %v626 = vld [vmem:[#allocation4 + $0x8] sm:$0xff]
        %v627 = vmul.f32 %v622, %v625
        %v628 = vmul.f32 %v624, %v626
        %630 = vset.pattern.permute.xlu0 0
        %631 = vperm.xlu0 %630, %v617
        %v632 = vpop.permute.xlu0 %631
        %635 = vset.pattern.permute.xlu0 0
        %636 = vperm.xlu0 %635, %v618
        %v637 = vpop.permute.xlu0 %636
        %v639 = vsub.f32 %v601, %v632
        %v640 = vsub.f32 %v603, %v632
        %v641 = vsub.f32 %v605, %v637
        %v642 = vsub.f32 %v607, %v637
        %v643 = vmul.f32 %v639, 1.442695
        %v644 = vpow.pop %v643
        %v645 = vmul.f32 %v640, 1.442695
        %v646 = vpow.pop %v645
        %v647 = vmul.f32 %v641, 1.442695
        %v648 = vpow.pop %v647
        %v649 = vmul.f32 %v642, 1.442695
        %v650 = vpow.pop %v649
        %v651 = vadd.f32 %v644, %v646
        %652 = vadd.xlane.f32.xlu0 %v651
        %v653 = vpop.xlane.xlu0 %652
        %v654 = vadd.f32 %v648, %v650
        %655 = vadd.xlane.f32.xlu0 %v654
        %v656 = vpop.xlane.xlu0 %655
        %v657 = vadd.f32 %v627, %v653
        %v658 = vadd.f32 %v628, %v656
        %vm659 = vcmask 7168
        %660 = vst.msk [vmem:[#allocation4] sm:$0xff] %vm659, %v657
        %661 = vst.msk [vmem:[#allocation4 + $0x8] sm:$0xff] %vm659, %v658
        %662 = vst.msk [vmem:[#allocation3] sm:$0xff] %vm659, %v617
        %663 = vst.msk [vmem:[#allocation3 + $0x8] sm:$0xff] %vm659, %v618
        %v664 = vlaneseq
        %v665 = vand.u32 %v664, 127
        %v666 = vadd.s32 %v665, 128
        %s667 = smul.u32 %s17, 256
        %v668 = vstv %s667
        %v669 = vadd.s32 %v665, %v668
        %v670 = vadd.s32 %v666, %v668
        %v671 = vld [vmem:[#allocation5] sm:$0xff]
        %v672 = vld [vmem:[#allocation5 + $0x8] sm:$0xff]
        %v673 = vld [vmem:[%s4] sm:$0xff]
        %v674 = vld [vmem:[%s4 + $0x8] sm:$0xff]
        %675 = vset.pattern.permute.xlu0 0
        %676 = vperm.xlu0 %675, %v673
        %v677 = vpop.permute.xlu0 %676
        %678 = vset.pattern.permute.xlu0 0
        %679 = vperm.xlu0 %678, %v674
        %v680 = vpop.permute.xlu0 %679
        %vm681 = vcmp.eq.s32.totalorder %v669, %v677
        %vm682 = vcmp.eq.s32.totalorder %v670, %v677
        %vm683 = vcmp.eq.s32.totalorder %v669, %v680
        %vm684 = vcmp.eq.s32.totalorder %v670, %v680
        %v685 = vsel %vm681, %v601, 0.0
        %v686 = vsel %vm682, %v603, 0.0
        %v687 = vsel %vm683, %v605, 0.0
        %v688 = vsel %vm684, %v607, 0.0
        %v689 = vadd.f32 %v685, %v686
        %690 = vadd.xlane.f32.xlu0 %v689
        %v691 = vpop.xlane.xlu0 %690
        %v692 = vadd.f32 %v687, %v688
        %693 = vadd.xlane.f32.xlu0 %v692
        %v694 = vpop.xlane.xlu0 %693
        %v695 = vadd.f32 %v671, %v691
        %v696 = vadd.f32 %v672, %v694
        %697 = vst.msk [vmem:[#allocation5] sm:$0xff] %vm659, %v695
        %698 = vst.msk [vmem:[#allocation5 + $0x8] sm:$0xff] %vm659, %v696
        %p699 = scmp.eq.s32.totalorder %s17, 1
        // Predicated region
        $region87: #{seq2seq_forward.1} parent=77 // pred_check
          %p700 = pneg %p699
        $region88: #{seq2seq_forward.1} parent=77 // pred_check_branch
          %702 = sbr.rel (%p700) target = $region90
        $region89: #{seq2seq_forward.1} parent=77 // pred_region
          %v703 = vld [vmem:[#allocation3] sm:$0xff]
          %v704 = vld [vmem:[#allocation3 + $0x8] sm:$0xff]
          %v705 = vld [vmem:[#allocation4] sm:$0xff]
          %v706 = vld [vmem:[#allocation4 + $0x8] sm:$0xff]
          %v707 = vlog2.pop %v705
          %v708 = vmul.f32 %v707, 0.6931472
          %v709 = vlog2.pop %v706
          %v710 = vmul.f32 %v709, 0.6931472
          %v711 = vadd.f32 %v703, %v708
          %v712 = vadd.f32 %v704, %v710
          %v713 = vld [vmem:[#allocation5] sm:$0xff]
          %v714 = vld [vmem:[#allocation5 + $0x8] sm:$0xff]
          %v715 = vsub.f32 %v711, %v713
          %v716 = vsub.f32 %v712, %v714
          %v717 = vld [vmem:[%s5] sm:$0xff]
          %v718 = vld [vmem:[%s5 + $0x8] sm:$0xff]
          %v719 = vmul.f32 %v715, %v717
          %v720 = vmul.f32 %v716, %v718
          %v721 = vsel %vm659, %v719, 0.0
          %v722 = vsel %vm659, %v720, 0.0
          %v723 = vadd.f32 %v721, %v722
          %724 = vadd.xlane.f32.xlu0 %v723
          %v725 = vpop.xlane.xlu0 %724
          %v726 = vrot.slane %v725, 4
          %v727 = vadd.f32 %v725, %v726
          %v728 = vrot.slane %v727, 2
          %v729 = vadd.f32 %v727, %v728
          %v730 = vrot.slane %v729, 1
          %v731 = vadd.f32 %v729, %v730
          %s732 = vtos %v731
          %v733 = vsel %vm659, %v717, 0.0
          %v734 = vsel %vm659, %v718, 0.0
          %v735 = vadd.f32 %v733, %v734
          %736 = vadd.xlane.f32.xlu0 %v735
          %v737 = vpop.xlane.xlu0 %736
          %v738 = vrot.slane %v737, 4
          %v739 = vadd.f32 %v737, %v738
          %v740 = vrot.slane %v739, 2
          %v741 = vadd.f32 %v739, %v740
          %v742 = vrot.slane %v741, 1
          %v743 = vadd.f32 %v741, %v742
          %s744 = vtos %v743
          %vm745 = vcmp.eq.s32.totalorder %v665, 0
          %v746 = vstv %s732
          %v747 = vstv %s744
          %v748 = vsel %vm745, %v746, %v747
          %vm749 = vcmask 8192
          %750 = vst.msk [vmem:[%s6] sm:$0x1] %vm749, %v748
        $region90: #{seq2seq_forward.1} parent=77 // pred_fallthru
          _
        // Predicated region
        $region91: #{seq2seq_forward.1} parent=77 // pred_check
          %p751 = pneg %p161
        $region92: #{seq2seq_forward.1} parent=77 // pred_check_branch
          %753 = sbr.rel (%p751) target = $region94
        $region93: #{seq2seq_forward.1} parent=77 // pred_region
          _
        $region94: #{seq2seq_forward.1} parent=77 // pred_fallthru
          _
        // Predicated region
        $region95: #{seq2seq_forward.1} parent=77 // pred_check
          %p754 = pneg %p161
        $region96: #{seq2seq_forward.1} parent=77 // pred_check_branch
          %756 = sbr.rel (%p754) target = $region98
        $region97: #{seq2seq_forward.1} parent=77 // pred_region
          _
        $region98: #{seq2seq_forward.1} parent=77 // pred_fallthru
          _
      $region78: #{seq2seq_forward.1} parent=5 // pred_fallthru
        _
      %p757 = scmp.le.s32.totalorder 2, %s12
      // Predicated region
      $region99: #{seq2seq_forward.1} parent=5 // pred_check
        %p758 = pneg %p757
      $region100: #{seq2seq_forward.1} parent=5 // pred_check_branch
        %760 = sbr.rel (%p758) target = $region102
      $region101: #{seq2seq_forward.1} parent=5 // pred_region
        %s761 = ssub.s32 %s12, 2
      $region102: #{seq2seq_forward.1} parent=5 // pred_fallthru
        _
    $region6: #{seq2seq_forward.1} parent=1 // loop_footer
      %s16 = sadd.s32 1, %s12
    $region7: #{seq2seq_forward.1} parent=1 // loop_footer_branch
      %11 = sbr.rel target = $region3
    $region8: #{seq2seq_forward.1} parent=1 // loop_exit
      _

</llo_original>
